<compile_context>
chip_gen: v6e
topology: v6e:2x2x1
jax: 0.10.0
libtpu: 0.0.40
codegen_flags: <defaults>
</compile_context>

<pallas_src>
import math
from functools import partial

import jax
import jax.numpy as jnp
from jax.experimental import pallas as pl
from jax.experimental.pallas import tpu as pltpu


# ----------------------------------------------------------------------------
# Helpers
# ----------------------------------------------------------------------------
def _round_up(v: int, m: int) -> int:
    return ((v + m - 1) // m) * m


def _pick_tile(total: int, max_tile: int, quantum: int = 128) -> int:
    """Largest multiple of `quantum` that divides `total` and is <= max_tile."""
    best = quantum
    t = quantum
    while t <= min(total, max_tile):
        if total % t == 0:
            best = t
        t += quantum
    return best


# ----------------------------------------------------------------------------
# Pallas kernels
# ----------------------------------------------------------------------------
def _matmul_bias_kernel(x_ref, m_ref, b_ref, o_ref):
    """Resident-M path: single MXU pass, output written in final dtype."""
    o_ref[...] = (
        jnp.dot(x_ref[...], m_ref[...], preferred_element_type=jnp.float32)
        + b_ref[...]
    ).astype(o_ref.dtype)


def _matmul_bias_acc_kernel(x_ref, m_ref, b_ref, o_ref):
    """K-tiled fallback: accumulate into f32 output block (no scratch)."""
    k = pl.program_id(2)

    @pl.when(k == 0)
    def _init():
        o_ref[...] = jnp.broadcast_to(b_ref[...], o_ref.shape)

    o_ref[...] += jnp.dot(x_ref[...], m_ref[...], preferred_element_type=jnp.float32)


# ----------------------------------------------------------------------------
# Forward: out = x @ M + bias   (M, bias already padded to 128-multiples)
# ----------------------------------------------------------------------------
def _inverse_comb_pallas(
    x,
    m_pad,
    bias_pad,
    T,
    *,
    tm_max=256,
    tn_max=512,
    tk_max=512,
    vmem_budget=20 * 1024 * 1024,
):
    B = x.shape[0]
    out_dtype = x.dtype
    itemsize = jnp.dtype(out_dtype).itemsize
    Kp, Np = m_pad.shape  # both == round_up(T, 128)

    # Batch tiling: pad to a multiple of 8; split into two blocks when it
    # divides cleanly so the "parallel" axis can feed both TCs on v7x.
    Bp = _round_up(B, 8)
    tm = min(tm_max, Bp)
    if tm == Bp and Bp >= 16 and Bp % 16 == 0:
        tm = Bp // 2
    Mp = _round_up(Bp, tm)

    # Only x needs padding per call (constants were padded in __init__);
    # under jit this pad fuses with the dispatch.
    x_p = jnp.pad(x.astype(jnp.float32), ((0, Mp - B), (0, Kp - T)))

    # VMEM footprint of the resident-M path (double-buffered conservatively).
    resident_bytes = 2 * (Kp * Np * 4 + tm * Kp * 4 + tm * Np * itemsize + Np * 4)

    if resident_bytes <= vmem_budget:
        # ---- Common path: M and bias resident in VMEM (constant block idx),
        #      grid only over batch tiles, no K loop, no accumulator scratch.
        grid = (Mp // tm,)
        out_p = pl.pallas_call(
            _matmul_bias_kernel,
            out_shape=jax.ShapeDtypeStruct((Mp, Np), out_dtype),
            grid_spec=pltpu.PrefetchScalarGridSpec(
                num_scalar_prefetch=0,
                grid=grid,
                in_specs=[
                    pl.BlockSpec((tm, Kp), lambda i: (i, 0)),   # x batch tile
                    pl.BlockSpec((Kp, Np), lambda i: (0, 0)),   # M, resident
                    pl.BlockSpec((1, Np), lambda i: (0, 0)),    # bias, resident
                ],
                out_specs=pl.BlockSpec((tm, Np), lambda i: (i, 0)),
            ),
            compiler_params=pltpu.CompilerParams(
                dimension_semantics=("parallel",),
            ),
            cost_estimate=pl.CostEstimate(
                flops=2 * Mp * Np * Kp,
                transcendentals=0,
                bytes_accessed=4 * (Mp * Kp + Kp * Np + Np) + itemsize * Mp * Np,
            ),
        )(x_p, m_pad, bias_pad)
        return out_p[:B, :T]

    # ---- Fallback: very large T, M does not fit resident.  K-tiled reduction
    #      accumulating directly into the f32 output; tn/tk divide the padded T.
    tn = _pick_tile(Np, tn_max)
    tk = _pick_tile(Kp, tk_max)
    grid = (Mp // tm, Np // tn, Kp // tk)
    out_p = pl.pallas_call(
        _matmul_bias_acc_kernel,
        out_shape=jax.ShapeDtypeStruct((Mp, Np), jnp.float32),
        grid_spec=pltpu.PrefetchScalarGridSpec(
            num_scalar_prefetch=0,
            grid=grid,
            in_specs=[
                pl.BlockSpec((tm, tk), lambda i, j, k: (i, k)),
                pl.BlockSpec((tk, tn), lambda i, j, k: (k, j)),
                pl.BlockSpec((1, tn), lambda i, j, k: (0, j)),
            ],
            out_specs=pl.BlockSpec((tm, tn), lambda i, j, k: (i, j)),
        ),
        compiler_params=pltpu.CompilerParams(
            dimension_semantics=("parallel", "parallel", "arbitrary"),
        ),
        cost_estimate=pl.CostEstimate(
            flops=2 * Mp * Np * Kp,
            transcendentals=0,
            bytes_accessed=4 * ((Np // tn) * Mp * Kp + (Mp // tm) * Kp * Np
                                + Np + 2 * Mp * Np),
        ),
    )(x_p, m_pad, bias_pad)
    return out_p[:B, :T].astype(out_dtype)


@partial(jax.jit, static_argnums=(3,))
def _forward_jit(x, m_pad, bias_pad, T):
    return _inverse_comb_pallas(x, m_pad, bias_pad, T)


# ----------------------------------------------------------------------------
# Module: parameter/buffer construction (plain JAX / Python glue)
# ----------------------------------------------------------------------------
class InverseComb:
    def __init__(self, in_time_dim: int, out_vector_dim: int):
        self.in_time_dim = in_time_dim
        self.out_vector_dim = out_vector_dim
        self.n_components = out_vector_dim + 1
        self.max_positive_freqs = in_time_dim // 2 + 1
        self.no_filtering = False

        if self.n_components > self.max_positive_freqs:
            print(
                f"[InverseComb Warning] Requested out_vector_dim+1="
                f"{self.n_components} is greater than {self.max_positive_freqs} "
                f"for in_time_dim={in_time_dim}. Skipping filtering."
            )
            self.no_filtering = True
            return

        T = in_time_dim
        # torch.linspace(0, max_pos-1, n_components) + round (round-half-even,
        # same convention as python round()).
        if self.n_components > 1:
            lin = [
                i * (self.max_positive_freqs - 1) / (self.n_components - 1)
                for i in range(self.n_components)
            ]
        else:
            lin = [0.0]
        positive_indices = [int(round(v)) for v in lin]

        mask = [False] * T
        for p in positive_indices:
            mask[p] = True
        if self.n_components > 1:
            for k in range(T - (self.n_components - 1), T):
                mask[k] = True

        self.override_index = positive_indices[0]  # always 0 (linspace from 0)
        forced = {self.override_index}
        if self.override_index != 0:
            forced.add(T - self.override_index)

        # Frequencies that keep their original (fft'd) value.
        kept = [k for k in range(T) if mask[k] and k not in forced]

        n_idx = jnp.arange(T, dtype=jnp.float32)
        m_idx = jnp.arange(T, dtype=jnp.float32)
        two_pi_over_T = 2.0 * math.pi / T

        if kept:
            kf = jnp.asarray(kept, dtype=jnp.float32)                 # (nk,)
            diff = n_idx[None, :] - m_idx[:, None]                    # (T, T)
            ang = two_pi_over_T * diff[:, :, None] * kf[None, None, :]
            M = jnp.sum(jnp.cos(ang), axis=-1) / T                    # (T, T)
        else:
            M = jnp.zeros((T, T), dtype=jnp.float32)

        ff = jnp.asarray(sorted(forced), dtype=jnp.float32)           # (nf,)
        bias = (
            jnp.sum(jnp.cos(two_pi_over_T * n_idx[:, None] * ff[None, :]), axis=-1)
            / jnp.sqrt(jnp.float32(T))
        )                                                             # (T,)

        # Kept in float32 (bf16 would breach the 1e-4 tolerance for larger T);
        # padded ONCE here to (8,128)-aligned shapes so the hot path never
        # touches the constants again.
        Kp = _round_up(T, 128)
        self.M = M.astype(jnp.float32)
        self.bias = bias.astype(jnp.float32)
        self.M_pad = jnp.zeros((Kp, Kp), jnp.float32).at[:T, :T].set(self.M)
        self.bias_pad = jnp.zeros((1, Kp), jnp.float32).at[0, :T].set(self.bias)
        self.freq_mask = jnp.asarray(mask)

    def __call__(self, x):
        if self.no_filtering:
            return x
        return _forward_jit(x, self.M_pad, self.bias_pad, self.in_time_dim)


# ----------------------------------------------------------------------------
# Pure-JAX reference (follows the torch code literally, with jnp.fft)
# ----------------------------------------------------------------------------
def _reference_forward(mod: InverseComb, x):
    if mod.no_filtering:
        return x
    T = mod.in_time_dim
    x_freq = jnp.fft.fft(x, norm="ortho")
    x_freq = jnp.where(mod.freq_mask[None, :], x_freq, 0.0 + 0.0j)
    x_freq = x_freq.at[:, mod.override_index].set(1.0 + 0.0j)
    if mod.override_index != 0:
        x_freq = x_freq.at[:, T - mod.override_index].set(1.0 + 0.0j)
    x_time = jnp.fft.ifft(x_freq, norm="ortho")
    return jnp.real(x_time)


if __name__ == "__main__":
    key = jax.random.PRNGKey(0)

    # --- Test 1: the module's nominal small shape (single resident tile) ----
    batch = 8
    in_time_dim = 16
    out_vector_dim = 3   # n_components = 4 <= in_time_dim//2 + 1 = 9

    mod = InverseComb(in_time_dim, out_vector_dim)
    k1, k2 = jax.random.split(key)
    x = jax.random.normal(k1, (batch, in_time_dim), dtype=jnp.float32)

    out = jax.block_until_ready(mod(x))
    ref = _reference_forward(mod, x)
    assert out.shape == (batch, in_time_dim)
    assert out.dtype == jnp.float32
    assert jnp.allclose(out, ref, atol=1e-4, rtol=1e-4), (
        f"max abs err = {jnp.max(jnp.abs(out - ref))}"
    )

    # --- Test 2: a larger shape (two batch blocks, resident 384x384 M) ------
    batch2 = 256
    in_time_dim2 = 384
    out_vector_dim2 = 7
    mod2 = InverseComb(in_time_dim2, out_vector_dim2)
    x2 = jax.random.normal(k2, (batch2, in_time_dim2), dtype=jnp.float32)

    out2 = jax.block_until_ready(mod2(x2))
    ref2 = _reference_forward(mod2, x2)
    assert out2.shape == (batch2, in_time_dim2)
    assert jnp.allclose(out2, ref2, atol=1e-4, rtol=1e-4), (
        f"max abs err = {jnp.max(jnp.abs(out2 - ref2))}"
    )

    print("KERNEL_OK")
</pallas_src>

<mosaic_0001>
module attributes {stable_mosaic.version = 11 : i64} {
  func.func @_matmul_bias_kernel(%arg0: i32, %arg1: memref<8x128xf32, #tpu.memory_space<vmem>>, %arg2: memref<128x128xf32, #tpu.memory_space<vmem>>, %arg3: memref<1x128xf32, #tpu.memory_space<vmem>>, %arg4: memref<8x128xf32, #tpu.memory_space<vmem>>) attributes {dimension_semantics = [#tpu.dimension_semantics<parallel>], iteration_bounds = array<i64: 1>, scalar_prefetch = 0 : i64, scratch_operands = 0 : i64, tpu.core_type = #tpu.core_type<tc>, window_params = [{transform_indices = @transform_0, window_bounds = array<i64: 8, 128>}, {pipeline_mode = #tpu.pipeline_mode<synchronous>, transform_indices = @transform_1, window_bounds = array<i64: 128, 128>}, {pipeline_mode = #tpu.pipeline_mode<synchronous>, transform_indices = @transform_2, window_bounds = array<i64: 1, 128>}, {transform_indices = @transform_3, window_bounds = array<i64: 8, 128>}]} {
    %c0 = arith.constant 0 : index
    %c0_0 = arith.constant 0 : index
    %0 = vector.load %arg1[%c0, %c0_0] : memref<8x128xf32, #tpu.memory_space<vmem>>, vector<8x128xf32>
    %c0_1 = arith.constant 0 : index
    %c0_2 = arith.constant 0 : index
    %1 = vector.load %arg2[%c0_1, %c0_2] : memref<128x128xf32, #tpu.memory_space<vmem>>, vector<128x128xf32>
    %cst = arith.constant dense<0.000000e+00> : vector<8x128xf32>
    %2 = tpu.matmul %0, %1, %cst {dimension_numbers = #tpu.dot_dimension_numbers<[1], [0], [0], [1], [0, 0, 1, 1], [], []>} : vector<8x128xf32>, vector<128x128xf32>, vector<8x128xf32> -> vector<8x128xf32>
    %c0_3 = arith.constant 0 : index
    %c0_4 = arith.constant 0 : index
    %3 = vector.load %arg3[%c0_3, %c0_4] : memref<1x128xf32, #tpu.memory_space<vmem>>, vector<1x128xf32>
    %4 = vector.broadcast %3 : vector<1x128xf32> to vector<8x128xf32>
    %5 = arith.addf %2, %4 : vector<8x128xf32>
    %c0_5 = arith.constant 0 : index
    %c0_6 = arith.constant 0 : index
    %6 = vector.load %arg4[%c0_5, %c0_6] : memref<8x128xf32, #tpu.memory_space<vmem>>, vector<8x128xf32>
    tpu.vector_store %arg4[%c0_5, %c0_6], %5 {strides = array<i32>} : memref<8x128xf32, #tpu.memory_space<vmem>>, vector<8x128xf32>,
    return
  }
  func.func @transform_0(%arg0: i32) -> (i32, i32) {
    %c0_i32 = arith.constant 0 : i32
    %c0_i32_0 = arith.constant 0 : i32
    return %arg0, %c0_i32 : i32, i32
  }
  func.func @transform_1(%arg0: i32) -> (i32, i32) {
    %c0_i32 = arith.constant 0 : i32
    %c0_i32_0 = arith.constant 0 : i32
    %c0_i32_1 = arith.constant 0 : i32
    return %c0_i32, %c0_i32_0 : i32, i32
  }
  func.func @transform_2(%arg0: i32) -> (i32, i32) {
    %c0_i32 = arith.constant 0 : i32
    %c0_i32_0 = arith.constant 0 : i32
    %c0_i32_1 = arith.constant 0 : i32
    return %c0_i32, %c0_i32_0 : i32, i32
  }
  func.func @transform_3(%arg0: i32) -> (i32, i32) {
    %c0_i32 = arith.constant 0 : i32
    %c0_i32_0 = arith.constant 0 : i32
    return %arg0, %c0_i32 : i32, i32
  }
}

</mosaic_0001>

<llo_original>
// kernel: _forward_jit.1
$region0: #{_forward_jit.1}
  #allocation0 [shape = 'u32[]', space=smem, size = 0x4, offset = 0x4, fixed_abs, tag = 'smem constant byte address 0x4 - core index']
  #allocation1 [shape = 'u32[144,128]{1,0:T(1,128)}', space=vmem, size = 0x12000, scoped, tag = 'internal scratch']
  %s0 = inlined_call_operand.vmem [shape: f32[8,128], index: 0, kind: input, shape index: {}]
  %s1 = inlined_call_operand.hbm [shape: f32[128,128], index: 1, kind: input, shape index: {}]
  %s2 = inlined_call_operand.vmem [shape: f32[1,128], index: 2, kind: input, shape index: {}]
  %s3 = inlined_call_operand.hbm [shape: f32[8,128], index: 3, kind: output, shape index: {}]
  %s4 = sld [smem:[#allocation0]]
  $region26: #{_forward_jit.1} parent=0
    _
  %s6 = ssub.s32 1, %s4
  %s7 = scalar_select 0, %s6, %s4
  $region1: #{_forward_jit.1} parent=0
    #allocation2 [shape = 'u8[65536]{0}', space=vmem, size = 0x10000, scoped, tag = 'input window, operand 1, single buffered']
    #allocation3 [shape = 's32[1]{0}', space=sflag, size = 0x4, scoped, tag = 'scoped memory for _forward_jit.1']
    #allocation4 [shape = 's32[1]{0}', space=sflag, size = 0x4, scoped, tag = 'scoped memory for _forward_jit.1']
    #allocation5 [shape = 'u8[4096]{0}', space=vmem, size = 0x1000, scoped, tag = 'output window, operand 0, single buffered']
    %8 = vsyncpa [#allocation3], 0
    %9 = vsyncpa [#allocation4], 0
    // Predicated region
    $region2: #{_forward_jit.1} parent=1 // pred_check
      _
    $region3: #{_forward_jit.1} parent=1 // pred_check_branch
      %11 = sbr.rel (0) target = $region5
    $region4: #{_forward_jit.1} parent=1 // pred_region
      _
    $region5: #{_forward_jit.1} parent=1 // pred_fallthru
      _
    // Predicated region
    $region6: #{_forward_jit.1} parent=1 // pred_check
      _
    $region7: #{_forward_jit.1} parent=1 // pred_check_branch
      %13 = sbr.rel (0) target = $region9
    $region8: #{_forward_jit.1} parent=1 // pred_region
      %s15 = ssub.s32 2048, 2048
      %16 = vsyncadd [#allocation3], %s15
      %s17 = sshll.u32 [#allocation2], 4
      %s18 = int_to_ptr.vmem [resolvable:$true] %s17
      %23 = dma.hbm_to_vmem [thread:$0]  %s1, 2048, %s18, [#allocation3], 128, 128, 8
    $region9: #{_forward_jit.1} parent=1 // pred_fallthru
      _
    // Predicated region
    $region10: #{_forward_jit.1} parent=1 // pred_check
      _
    $region11: #{_forward_jit.1} parent=1 // pred_check_branch
      %25 = sbr.rel (0) target = $region13
    $region12: #{_forward_jit.1} parent=1 // pred_region
      _
    $region13: #{_forward_jit.1} parent=1 // pred_fallthru
      _
    // Predicated region
    $region14: #{_forward_jit.1} parent=1 // pred_check
      _
    $region15: #{_forward_jit.1} parent=1 // pred_check_branch
      %27 = sbr.rel (0) target = $region17
    $region16: #{_forward_jit.1} parent=1 // pred_region
      %28 = dma.done [#allocation3], 2048
    $region17: #{_forward_jit.1} parent=1 // pred_fallthru
      _
    %v29 = vld [vmem:[%s0] sm:$0xff]
    %v30 = vld [vmem:[#allocation2] sm:$0xff]
    %v31 = vld [vmem:[#allocation2 + $0x8] sm:$0xff]
    %v32 = vld [vmem:[#allocation2 + $0x10] sm:$0xff]
    %v33 = vld [vmem:[#allocation2 + $0x18] sm:$0xff]
    %v34 = vld [vmem:[#allocation2 + $0x20] sm:$0xff]
    %v35 = vld [vmem:[#allocation2 + $0x28] sm:$0xff]
    %v36 = vld [vmem:[#allocation2 + $0x30] sm:$0xff]
    %v37 = vld [vmem:[#allocation2 + $0x38] sm:$0xff]
    %v38 = vld [vmem:[#allocation2 + $0x40] sm:$0xff]
    %v39 = vld [vmem:[#allocation2 + $0x48] sm:$0xff]
    %v40 = vld [vmem:[#allocation2 + $0x50] sm:$0xff]
    %v41 = vld [vmem:[#allocation2 + $0x58] sm:$0xff]
    %v42 = vld [vmem:[#allocation2 + $0x60] sm:$0xff]
    %v43 = vld [vmem:[#allocation2 + $0x68] sm:$0xff]
    %v44 = vld [vmem:[#allocation2 + $0x70] sm:$0xff]
    %v45 = vld [vmem:[#allocation2 + $0x78] sm:$0xff]
    %v46 = vld [vmem:[%s2] sm:$0x1]
    %v48 = vlaneseq
    %v49 = vshrl.u32 %v48, 7
    %v50 = vsub.s32 0, %v49
    %v51 = vrot.slane %v46, %v50
    %53 = vmatprep.subr.mxu0 0.0
    %54 = vmatpush1.msra.mxu0 %v45
    %55 = vmatprep.subr.mxu0 0.0
    %56 = vmatpush1.msra.mxu0 %v44
    %57 = vmatprep.subr.mxu0 0.0
    %58 = vmatpush1.msra.mxu0 %v43
    %59 = vmatprep.subr.mxu0 0.0
    %60 = vmatpush1.msra.mxu0 %v42
    %61 = vmatprep.subr.mxu0 0.0
    %62 = vmatpush1.msra.mxu0 %v41
    %63 = vmatprep.subr.mxu0 0.0
    %64 = vmatpush1.msra.mxu0 %v40
    %65 = vmatprep.subr.mxu0 0.0
    %66 = vmatpush1.msra.mxu0 %v39
    %67 = vmatprep.subr.mxu0 0.0
    %68 = vmatpush1.msra.mxu0 %v38
    %69 = vmatprep.subr.mxu0 0.0
    %70 = vmatpush1.msra.mxu0 %v37
    %71 = vmatprep.subr.mxu0 0.0
    %72 = vmatpush1.msra.mxu0 %v36
    %73 = vmatprep.subr.mxu0 0.0
    %74 = vmatpush1.msra.mxu0 %v35
    %75 = vmatprep.subr.mxu0 0.0
    %76 = vmatpush1.msra.mxu0 %v34
    %77 = vmatprep.subr.mxu0 0.0
    %78 = vmatpush1.msra.mxu0 %v33
    %79 = vmatprep.subr.mxu0 0.0
    %80 = vmatpush1.msra.mxu0 %v32
    %81 = vmatprep.subr.mxu0 0.0
    %82 = vmatpush1.msra.mxu0 %v31
    %83 = vmatprep.subr.mxu0 0.0
    %84 = vmatpush1.msra.mxu0 %v30
    %85 = vmatprep.subr.mxu0 0.0
    %86 = vmatpush2.msra.mxu0 0.0
    %87 = vmatprep.subr.mxu0 0.0
    %88 = vmatpush2.msra.mxu0 0.0
    %89 = vmatprep.subr.mxu0 0.0
    %90 = vmatpush2.msra.mxu0 0.0
    %91 = vmatprep.subr.mxu0 0.0
    %92 = vmatpush2.msra.mxu0 0.0
    %93 = vmatprep.subr.mxu0 0.0
    %94 = vmatpush2.msra.mxu0 0.0
    %95 = vmatprep.subr.mxu0 0.0
    %96 = vmatpush2.msra.mxu0 0.0
    %97 = vmatprep.subr.mxu0 0.0
    %98 = vmatpush2.msra.mxu0 0.0
    %99 = vmatprep.subr.mxu0 0.0
    %100 = vmatpush2.msra.mxu0 0.0
    %101 = vmatprep.subr.mxu0 0.0
    %102 = vmatpush2.msra.mxu0 0.0
    %103 = vmatprep.subr.mxu0 0.0
    %104 = vmatpush2.msra.mxu0 0.0
    %105 = vmatprep.subr.mxu0 0.0
    %106 = vmatpush2.msra.mxu0 0.0
    %107 = vmatprep.subr.mxu0 0.0
    %108 = vmatpush2.msra.mxu0 0.0
    %109 = vmatprep.subr.mxu0 0.0
    %110 = vmatpush2.msra.mxu0 0.0
    %111 = vmatprep.subr.mxu0 0.0
    %112 = vmatpush2.msra.mxu0 0.0
    %113 = vmatprep.subr.mxu0 0.0
    %114 = vmatpush2.msra.mxu0 0.0
    %115 = vmatprep.subr.mxu0 0.0
    %116 = vmatpush2.msra.mxu0 0.0
    %117 = vmatprep.mubr.f32.mxu0 0.0
    %118 = vmatmul.mubr.f32.gmra.mxu0 %v29
    %v119 = vpop.f32.mrf.mxu0
    %v120 = vadd.f32 %v51, %v119
    %v121 = vpop.f32.mrf.mxu0
    %122 = vdwg.mxu0
    %123 = vst [vmem:[#allocation5] sm:$0xff] %v120
    // Predicated region
    $region18: #{_forward_jit.1} parent=1 // pred_check
      _
    $region19: #{_forward_jit.1} parent=1 // pred_check_branch
      %125 = sbr.rel (0) target = $region21
    $region20: #{_forward_jit.1} parent=1 // pred_region
      %s127 = ssub.s32 128, 128
      %128 = vsyncadd [#allocation4], %s127
      %s130 = sshll.u32 [#allocation5], 4
      %s131 = int_to_ptr.vmem [resolvable:$true] %s130
      %133 = dma.vmem_to_hbm [thread:$0]  %s131, 128, %s3, [#allocation4]
    $region21: #{_forward_jit.1} parent=1 // pred_fallthru
      _
    // Predicated region
    $region22: #{_forward_jit.1} parent=1 // pred_check
      _
    $region23: #{_forward_jit.1} parent=1 // pred_check_branch
      %135 = sbr.rel (0) target = $region25
    $region24: #{_forward_jit.1} parent=1 // pred_region
      %136 = dma.done [#allocation4], 128
    $region25: #{_forward_jit.1} parent=1 // pred_fallthru
      _
    %137 = vsyncpa [#allocation3], 1
    %138 = vsyncpa [#allocation4], 1

</llo_original>
